<compile_context>
chip_gen: v6e
topology: v6e:2x2x1
jax: 0.10.0
libtpu: 0.0.40
codegen_flags: <defaults>
</compile_context>

<pallas_src>
import jax
import jax.numpy as jnp
from jax.experimental import pallas as pl
from jax.experimental.pallas import tpu as pltpu


def _round_up(x, m):
    return ((x + m - 1) // m) * m


# Target size of ONE buffer of the (double-buffered) x tile.  ~8 MiB/buffer
# -> ~16 MiB of x in flight + ~1 MiB of output buffers, well under the 32 MiB
# scoped limit requested below on every generation (v5e/v6e/v7x).
_X_BYTES_PER_BUFFER = 8 * 1024 * 1024


def _pick_tile(B, D, itemsize):
    """Rows per batch tile, budgeted against the lane-padded VMEM footprint."""
    row_bytes = _round_up(max(D, 1), 128) * max(itemsize, 1)   # lanes pad to 128
    cap = max(128, (_X_BYTES_PER_BUFFER // row_bytes) // 128 * 128)
    if B <= min(1024, cap):
        return B                     # single full-array tile (always legal)
    # >= 2 tiles so v7x can split the "parallel" axis across both TensorCores,
    # but never exceed the VMEM-derived cap.
    return min(cap, _round_up(pl.cdiv(B, 2), 128))


def _net_kernel(x_ref, w_ref, b_ref, o_ref):
    # x_ref: (TM, D) VMEM  - current batch tile (auto double-buffered)
    # w_ref: (1, D)  VMEM  - nn.Linear weight row, resident across grid steps
    # b_ref: (1,)    SMEM  - scalar bias
    # o_ref: (1, TM) VMEM  - lane-dense output row for this tile
    x = x_ref[...].astype(jnp.float32)
    w = w_ref[...].astype(jnp.float32)            # (1, D) broadcast over rows
    b = b_ref[0]
    # Output dim is 1 -> skip the MXU; VPU multiply + XLU lane reduce, f32 acc.
    logits = jnp.sum(x * w, axis=-1) + b          # (TM,)
    y = jax.nn.sigmoid(logits)
    # Lane-dense store: the sublane->lane relayout rides the otherwise-idle XLU.
    o_ref[...] = y[None, :].astype(o_ref.dtype)


def net_forward(x, weight, bias, *, tm=None):
    """Pallas equivalent of Net.forward: sigmoid(x @ weight.T + bias).

    x:      (B, D)
    weight: (1, D)  (PyTorch nn.Linear weight layout)
    bias:   (1,)
    returns (B, 1) in x.dtype
    """
    B, D = x.shape

    if tm is None:
        tm = _pick_tile(B, D, jnp.dtype(x.dtype).itemsize)
    tm = int(tm)
    if tm < B:
        tm = max(8, (tm // 8) * 8)    # second-minor block dim must be 8-aligned
    tm = min(tm, B)                   # full-array block is always legal

    num_tiles = pl.cdiv(B, tm)

    weight_f32 = weight.astype(jnp.float32)            # keep full precision
    bias_f32 = bias.astype(jnp.float32).reshape((1,))

    out = pl.pallas_call(
        _net_kernel,
        out_shape=jax.ShapeDtypeStruct((num_tiles, tm), x.dtype),
        grid=(num_tiles,),
        in_specs=[
            # x tile: pipelined, prefetch i+1 while computing i.
            pl.BlockSpec((tm, D), lambda i: (i, 0)),
            # weight row: constant index map -> stays resident in VMEM.
            pl.BlockSpec((1, D), lambda i: (0, 0)),
            # scalar bias in SMEM (no per-step VMEM DMA).
            pl.BlockSpec(memory_space=pltpu.MemorySpace.SMEM),
        ],
        # Lane-dense output: one (1, tm) row per grid step.
        out_specs=pl.BlockSpec((1, tm), lambda i: (i, 0)),
        compiler_params=pltpu.CompilerParams(
            dimension_semantics=("parallel",),
            # Explicit so large tiles compile on v5e's 16 MiB default scoped
            # VMEM; still well inside v7x's 64 MiB physical VMEM.
            vmem_limit_bytes=32 * 1024 * 1024,
        ),
    )(x, weight_f32, bias_f32)

    # (num_tiles, tm) -> (B, 1).  Rows past B (ragged last tile, undefined x
    # reads) are dropped here; safe because there is no cross-row reduction.
    return out.reshape(num_tiles * tm)[:B].reshape(B, 1)


def _reference(x, weight, bias):
    return jax.nn.sigmoid(x @ weight.T + bias)


if __name__ == "__main__":
    key = jax.random.PRNGKey(0)
    k_x, k_w, k_b = jax.random.split(key, 3)

    B = 8            # batch
    input_size = 32  # feature dim

    x = jax.random.normal(k_x, (B, input_size), dtype=jnp.float32)
    # Same shapes as nn.Linear(input_size, 1) parameters.
    weight = jax.random.normal(k_w, (1, input_size), dtype=jnp.float32) * 0.1
    bias = jax.random.normal(k_b, (1,), dtype=jnp.float32) * 0.1

    out = jax.block_until_ready(net_forward(x, weight, bias))
    ref = _reference(x, weight, bias)
    assert out.shape == (B, 1), out.shape
    assert jnp.allclose(out, ref, atol=1e-5, rtol=1e-5)

    # Multi-tile path: grid of 2, ragged trailing tile (no wrapper-side pad),
    # lane-dense (1, TM) output rows.
    B2 = 2200
    x2 = jax.random.normal(k_x, (B2, input_size), dtype=jnp.float32)
    out2 = jax.block_until_ready(net_forward(x2, weight, bias))
    ref2 = _reference(x2, weight, bias)
    assert out2.shape == (B2, 1), out2.shape
    assert jnp.allclose(out2, ref2, atol=1e-5, rtol=1e-5)

    print("KERNEL_OK")
</pallas_src>

<mosaic_0001>
module attributes {stable_mosaic.version = 11 : i64} {
  func.func @_net_kernel(%arg0: i32, %arg1: memref<8x32xf32, #tpu.memory_space<vmem>>, %arg2: memref<1x32xf32, #tpu.memory_space<vmem>>, %arg3: memref<1xf32, #tpu.memory_space<smem>>, %arg4: memref<1x8xf32, #tpu.memory_space<vmem>>) attributes {dimension_semantics = [#tpu.dimension_semantics<parallel>], iteration_bounds = array<i64: 1>, scalar_prefetch = 0 : i64, scratch_operands = 0 : i64, tpu.core_type = #tpu.core_type<tc>, window_params = [{transform_indices = @transform_0, window_bounds = array<i64: 8, 32>}, {pipeline_mode = #tpu.pipeline_mode<synchronous>, transform_indices = @transform_1, window_bounds = array<i64: 1, 32>}, {transform_indices = @transform_2, window_bounds = array<i64: 1>}, {transform_indices = @transform_3, window_bounds = array<i64: 1, 8>}]} {
    %c0 = arith.constant 0 : index
    %c0_0 = arith.constant 0 : index
    %0 = vector.load %arg1[%c0, %c0_0] : memref<8x32xf32, #tpu.memory_space<vmem>>, vector<8x32xf32>
    %c0_1 = arith.constant 0 : index
    %c0_2 = arith.constant 0 : index
    %1 = vector.load %arg2[%c0_1, %c0_2] : memref<1x32xf32, #tpu.memory_space<vmem>>, vector<1x32xf32>
    %c0_3 = arith.constant 0 : index
    %2 = memref.load %arg3[%c0_3] : memref<1xf32, #tpu.memory_space<smem>>
    %3 = vector.broadcast %1 : vector<1x32xf32> to vector<8x32xf32>
    %4 = arith.mulf %0, %3 : vector<8x32xf32>
    %cst = arith.constant dense<0.000000e+00> : vector<8xf32>
    %5 = vector.multi_reduction <add>, %4, %cst [1] : vector<8x32xf32> to vector<8xf32>
    %6 = vector.broadcast %2 : f32 to vector<8xf32>
    %7 = arith.addf %5, %6 : vector<8xf32>
    %8 = arith.negf %7 : vector<8xf32>
    %9 = math.exp %8 : vector<8xf32>
    %cst_4 = arith.constant 1.000000e+00 : f32
    %10 = vector.broadcast %cst_4 : f32 to vector<8xf32>
    %11 = arith.addf %10, %9 : vector<8xf32>
    %12 = arith.divf %10, %11 : vector<8xf32>
    %13 = vector.shape_cast %12 : vector<8xf32> to vector<1x8xf32>
    %c0_5 = arith.constant 0 : index
    %c0_6 = arith.constant 0 : index
    %14 = vector.load %arg4[%c0_5, %c0_6] : memref<1x8xf32, #tpu.memory_space<vmem>>, vector<1x8xf32>
    tpu.vector_store %arg4[%c0_5, %c0_6], %13 {strides = array<i32>} : memref<1x8xf32, #tpu.memory_space<vmem>>, vector<1x8xf32>,
    return
  }
  func.func @transform_0(%arg0: i32) -> (i32, i32) {
    %c0_i32 = arith.constant 0 : i32
    %c0_i32_0 = arith.constant 0 : i32
    return %arg0, %c0_i32 : i32, i32
  }
  func.func @transform_1(%arg0: i32) -> (i32, i32) {
    %c0_i32 = arith.constant 0 : i32
    %c0_i32_0 = arith.constant 0 : i32
    %c0_i32_1 = arith.constant 0 : i32
    return %c0_i32, %c0_i32_0 : i32, i32
  }
  func.func @transform_2(%arg0: i32) -> i32 {
    %c0_i32 = arith.constant 0 : i32
    %c0_i32_0 = arith.constant 0 : i32
    return %c0_i32 : i32
  }
  func.func @transform_3(%arg0: i32) -> (i32, i32) {
    %c0_i32 = arith.constant 0 : i32
    %c0_i32_0 = arith.constant 0 : i32
    return %arg0, %c0_i32 : i32, i32
  }
}

</mosaic_0001>

<llo_original>
// kernel: tpu_custom_call.1
$region0: #{tpu_custom_call.1}
  #allocation0 [shape = 'u32[]', space=smem, size = 0x4, offset = 0x4, fixed_abs, tag = 'smem constant byte address 0x4 - core index']
  #allocation1 [shape = 'u32[144,128]{1,0:T(1,128)}', space=vmem, size = 0x12000, scoped, tag = 'internal scratch']
  #allocation2 [shape = 'f32[1]{0:T(128)S(6)}', space=smem, size = 0x200, scoped, tag = 'scoped memory for tpu_custom_call.1']
  %s0 = inlined_call_operand.hbm [shape: f32[8,32], index: 0, kind: input, shape index: {}]
  %s1 = inlined_call_operand.vmem [shape: f32[1,32], index: 1, kind: input, shape index: {}]
  %s2 = inlined_call_operand.<no memory space> [shape: f32[1], index: 2, kind: input, shape index: {}]
  %s3 = inlined_call_operand.hbm [shape: f32[1,8], index: 3, kind: output, shape index: {}]
  %s4 = sld [smem:[#allocation0]]
  $region26: #{tpu_custom_call.1} parent=0
    _
  %s6 = ssub.s32 1, %s4
  %s7 = scalar_select 0, %s6, %s4
  %8 = sst [smem:[#allocation2]] %s2
  $region1: #{tpu_custom_call.1} parent=0
    #allocation3 [shape = 'u8[4096]{0}', space=vmem, size = 0x1000, scoped, tag = 'input window, operand 0, single buffered']
    #allocation4 [shape = 's32[1]{0}', space=sflag, size = 0x4, scoped, tag = 'scoped memory for tpu_custom_call.1']
    #allocation5 [shape = 's32[1]{0}', space=sflag, size = 0x4, scoped, tag = 'scoped memory for tpu_custom_call.1']
    #allocation6 [shape = 'u8[512]{0}', space=vmem, size = 0x400, scoped, tag = 'output window, operand 0, single buffered']
    %9 = vsyncpa [#allocation4], 0
    %10 = vsyncpa [#allocation5], 0
    // Predicated region
    $region2: #{tpu_custom_call.1} parent=1 // pred_check
      _
    $region3: #{tpu_custom_call.1} parent=1 // pred_check_branch
      %12 = sbr.rel (0) target = $region5
    $region4: #{tpu_custom_call.1} parent=1 // pred_region
      %s14 = ssub.s32 128, 128
      %15 = vsyncadd [#allocation4], %s14
      %s17 = sshll.u32 [#allocation3], 4
      %s18 = int_to_ptr.vmem [resolvable:$true] %s17
      %20 = dma.hbm_to_vmem [thread:$0]  %s0, 128, %s18, [#allocation4]
    $region5: #{tpu_custom_call.1} parent=1 // pred_fallthru
      _
    // Predicated region
    $region6: #{tpu_custom_call.1} parent=1 // pred_check
      _
    $region7: #{tpu_custom_call.1} parent=1 // pred_check_branch
      %22 = sbr.rel (0) target = $region9
    $region8: #{tpu_custom_call.1} parent=1 // pred_region
      _
    $region9: #{tpu_custom_call.1} parent=1 // pred_fallthru
      _
    // Predicated region
    $region10: #{tpu_custom_call.1} parent=1 // pred_check
      _
    $region11: #{tpu_custom_call.1} parent=1 // pred_check_branch
      %24 = sbr.rel (0) target = $region13
    $region12: #{tpu_custom_call.1} parent=1 // pred_region
      _
    $region13: #{tpu_custom_call.1} parent=1 // pred_fallthru
      _
    // Predicated region
    $region14: #{tpu_custom_call.1} parent=1 // pred_check
      _
    $region15: #{tpu_custom_call.1} parent=1 // pred_check_branch
      %26 = sbr.rel (0) target = $region17
    $region16: #{tpu_custom_call.1} parent=1 // pred_region
      %27 = dma.done [#allocation4], 128
    $region17: #{tpu_custom_call.1} parent=1 // pred_fallthru
      _
    %v28 = vld [vmem:[#allocation3] sm:$0xff]
    %v29 = vld [vmem:[%s1] sm:$0x1]
    %s30 = sld [smem:[#allocation2]]
    %v32 = vlaneseq
    %v33 = vshrl.u32 %v32, 7
    %v34 = vsub.s32 0, %v33
    %v35 = vrot.slane %v29, %v34
    %v37 = vmul.f32 %v28, %v35
    %vm38 = vcmask 261120
    %v39 = vsel %vm38, %v37, 0.0
    %40 = vadd.xlane.f32.xlu0 %v39
    %v41 = vpop.xlane.xlu0 %40
    %v42 = vstv %s30
    %v43 = vadd.f32 %v41, %v42
    %v44 = vxor.u32 %v43, 2147483648
    %v45 = vmul.f32 %v44, 1.442695
    %v46 = vpow.pop %v45
    %v47 = vadd.f32 %v46, 1.0
    %v48 = vrcp.pop %v47
    %v49 = vmul.f32 1.0, %v48
    %v51 = vlaneseq
    %v52 = vand.u32 %v51, 127
    %v53 = vlaneseq
    %v54 = vshrl.u32 %v53, 7
    %v55 = vsub.s32 %v52, %v54
    %v56 = vrot.slane %v49, %v55
    %vm58 = vcmask 57344
    %59 = vst.msk [vmem:[#allocation6] sm:$0x1] %vm58, %v56
    // Predicated region
    $region18: #{tpu_custom_call.1} parent=1 // pred_check
      _
    $region19: #{tpu_custom_call.1} parent=1 // pred_check_branch
      %61 = sbr.rel (0) target = $region21
    $region20: #{tpu_custom_call.1} parent=1 // pred_region
      %s63 = ssub.s32 16, 16
      %64 = vsyncadd [#allocation5], %s63
      %s66 = sshll.u32 [#allocation6], 4
      %s67 = int_to_ptr.vmem [resolvable:$true] %s66
      %69 = dma.vmem_to_hbm [thread:$0]  %s67, 16, %s3, [#allocation5]
    $region21: #{tpu_custom_call.1} parent=1 // pred_fallthru
      _
    // Predicated region
    $region22: #{tpu_custom_call.1} parent=1 // pred_check
      _
    $region23: #{tpu_custom_call.1} parent=1 // pred_check_branch
      %71 = sbr.rel (0) target = $region25
    $region24: #{tpu_custom_call.1} parent=1 // pred_region
      %72 = dma.done [#allocation5], 16
    $region25: #{tpu_custom_call.1} parent=1 // pred_fallthru
      _
    %73 = vsyncpa [#allocation4], 1
    %74 = vsyncpa [#allocation5], 1

</llo_original>
